<compile_context>
chip_gen: v6e
topology: v6e:2x2x1
jax: 0.10.0
libtpu: 0.0.40
codegen_flags: <defaults>
</compile_context>

<pallas_src>
import jax
import jax.numpy as jnp
from jax.experimental import pallas as pl
from jax.experimental.pallas import tpu as pltpu


def _round_up(x, m):
    return (x + m - 1) // m * m


# ---------------------------------------------------------------------------
# Pallas kernel: per M-tile, compute  relu(x @ W1 + b1) @ W2 + b2
# ---------------------------------------------------------------------------
def _mlp_kernel(x_ref, w1_ref, b1_ref, w2_ref, b2_ref, o_ref):
    # x_ref : (tm, D)  bf16      w1_ref: (D, H) bf16    b1_ref: (1, H) f32
    # w2_ref: (H, N)   bf16      b2_ref: (1, N) f32     o_ref : (tm, N) f32
    h = jnp.dot(x_ref[...], w1_ref[...], preferred_element_type=jnp.float32)
    h = jnp.maximum(h + b1_ref[...], 0.0)
    out = jnp.dot(h.astype(w2_ref.dtype), w2_ref[...],
                  preferred_element_type=jnp.float32)
    o_ref[...] = (out + b2_ref[...]).astype(o_ref.dtype)


# ---------------------------------------------------------------------------
# Wrapper
# ---------------------------------------------------------------------------
def mlp_forward(params, x, *, tm=256):
    """x: (..., input_dim) float32.  Returns (..., output_dim) float32."""
    w1, b1, w2, b2 = params["w1"], params["b1"], params["w2"], params["b2"]
    orig_shape = x.shape
    D = orig_shape[-1]
    H = w1.shape[0]        # PyTorch Linear layout: (out_features, in_features)
    N = w2.shape[0]

    x2d = x.reshape(-1, D)
    M = x2d.shape[0]

    # Row tile: multiple of 8 (sublane), capped at tm; pad M only.
    tm_eff = min(tm, _round_up(M, 8))
    Mp = _round_up(M, tm_eff)
    if Mp != M:
        x2d = jnp.pad(x2d, ((0, Mp - M), (0, 0)))

    # bf16 operands for the MXU; f32 accumulation inside the kernel.
    x_bf = x2d.astype(jnp.bfloat16)
    w1_t = jnp.transpose(w1).astype(jnp.bfloat16)      # (D, H)
    w2_t = jnp.transpose(w2).astype(jnp.bfloat16)      # (H, N)
    b1_2d = b1.reshape(1, H).astype(jnp.float32)
    b2_2d = b2.reshape(1, N).astype(jnp.float32)

    grid = (Mp // tm_eff,)
    flops = 2 * Mp * D * H + 2 * Mp * H * N
    bytes_accessed = (x_bf.size * 2 + w1_t.size * 2 + w2_t.size * 2
                      + b1_2d.size * 4 + b2_2d.size * 4 + Mp * N * 4)

    out = pl.pallas_call(
        _mlp_kernel,
        out_shape=jax.ShapeDtypeStruct((Mp, N), jnp.float32),
        grid=grid,
        in_specs=[
            pl.BlockSpec((tm_eff, D), lambda i: (i, 0)),   # x tile (pipelined)
            pl.BlockSpec((D, H), lambda i: (0, 0)),        # W1 (VMEM-resident)
            pl.BlockSpec((1, H), lambda i: (0, 0)),        # b1
            pl.BlockSpec((H, N), lambda i: (0, 0)),        # W2 (VMEM-resident)
            pl.BlockSpec((1, N), lambda i: (0, 0)),        # b2
        ],
        out_specs=pl.BlockSpec((tm_eff, N), lambda i: (i, 0)),
        compiler_params=pltpu.CompilerParams(
            dimension_semantics=("parallel",)),
        cost_estimate=pl.CostEstimate(
            flops=flops, transcendentals=0, bytes_accessed=bytes_accessed),
    )(x_bf, w1_t, b1_2d, w2_t, b2_2d)

    out = out[:M]
    return out.reshape(*orig_shape[:-1], N)


# ---------------------------------------------------------------------------
# Parameter init (mirrors torch.nn.Linear default init)
# ---------------------------------------------------------------------------
def init_mlp_params(key, input_dim, hidden_dim, output_dim):
    k1, k2, k3, k4 = jax.random.split(key, 4)
    bound1 = 1.0 / (input_dim ** 0.5)
    bound2 = 1.0 / (hidden_dim ** 0.5)
    return {
        "w1": jax.random.uniform(k1, (hidden_dim, input_dim), jnp.float32,
                                 -bound1, bound1),
        "b1": jax.random.uniform(k2, (hidden_dim,), jnp.float32,
                                 -bound1, bound1),
        "w2": jax.random.uniform(k3, (output_dim, hidden_dim), jnp.float32,
                                 -bound2, bound2),
        "b2": jax.random.uniform(k4, (output_dim,), jnp.float32,
                                 -bound2, bound2),
    }


def mlp_reference(params, x):
    h = jnp.maximum(x @ params["w1"].T + params["b1"], 0.0)
    return h @ params["w2"].T + params["b2"]


if __name__ == "__main__":
    key = jax.random.PRNGKey(0)
    pkey, xkey = jax.random.split(key)

    input_dim, hidden_dim, output_dim = 32, 128, 64
    params = init_mlp_params(pkey, input_dim, hidden_dim, output_dim)

    # Small input: batch=8, seq=64, features=32 -> 512 rows, 2 row-tiles of 256
    # (exercises the pipelined grid and the parallel dimension semantic).
    x = jax.random.normal(xkey, (8, 64, input_dim), jnp.float32)

    out = mlp_forward(params, x)
    out = jax.block_until_ready(out)

    assert out.shape == (8, 64, output_dim), out.shape
    assert bool(jnp.all(jnp.isfinite(out)))

    # Loose tolerance: kernel uses bf16 matmul operands with f32 accumulation.
    ref = mlp_reference(params, x)
    assert bool(jnp.allclose(out, ref, atol=5e-2, rtol=5e-2))

    print("KERNEL_OK")
</pallas_src>

<mosaic_0001>
module attributes {stable_mosaic.version = 11 : i64} {
  func.func @_mlp_kernel(%arg0: i32, %arg1: memref<256x32xbf16, #tpu.memory_space<vmem>>, %arg2: memref<32x128xbf16, #tpu.memory_space<vmem>>, %arg3: memref<1x128xf32, #tpu.memory_space<vmem>>, %arg4: memref<128x64xbf16, #tpu.memory_space<vmem>>, %arg5: memref<1x64xf32, #tpu.memory_space<vmem>>, %arg6: memref<256x64xf32, #tpu.memory_space<vmem>>) attributes {dimension_semantics = [#tpu.dimension_semantics<parallel>], iteration_bounds = array<i64: 2>, scalar_prefetch = 0 : i64, scratch_operands = 0 : i64, tpu.core_type = #tpu.core_type<tc>, window_params = [{transform_indices = @transform_0, window_bounds = array<i64: 256, 32>}, {pipeline_mode = #tpu.pipeline_mode<synchronous>, transform_indices = @transform_1, window_bounds = array<i64: 32, 128>}, {pipeline_mode = #tpu.pipeline_mode<synchronous>, transform_indices = @transform_2, window_bounds = array<i64: 1, 128>}, {pipeline_mode = #tpu.pipeline_mode<synchronous>, transform_indices = @transform_3, window_bounds = array<i64: 128, 64>}, {pipeline_mode = #tpu.pipeline_mode<synchronous>, transform_indices = @transform_4, window_bounds = array<i64: 1, 64>}, {transform_indices = @transform_5, window_bounds = array<i64: 256, 64>}]} {
    %c0 = arith.constant 0 : index
    %c0_0 = arith.constant 0 : index
    %0 = vector.load %arg1[%c0, %c0_0] : memref<256x32xbf16, #tpu.memory_space<vmem>>, vector<256x32xbf16>
    %c0_1 = arith.constant 0 : index
    %c0_2 = arith.constant 0 : index
    %1 = vector.load %arg2[%c0_1, %c0_2] : memref<32x128xbf16, #tpu.memory_space<vmem>>, vector<32x128xbf16>
    %cst = arith.constant dense<0.000000e+00> : vector<256x128xf32>
    %2 = tpu.matmul %0, %1, %cst {dimension_numbers = #tpu.dot_dimension_numbers<[1], [0], [0], [1], [0, 0, 1, 1], [], []>} : vector<256x32xbf16>, vector<32x128xbf16>, vector<256x128xf32> -> vector<256x128xf32>
    %c0_3 = arith.constant 0 : index
    %c0_4 = arith.constant 0 : index
    %3 = vector.load %arg3[%c0_3, %c0_4] : memref<1x128xf32, #tpu.memory_space<vmem>>, vector<1x128xf32>
    %4 = vector.broadcast %3 : vector<1x128xf32> to vector<256x128xf32>
    %5 = arith.addf %2, %4 : vector<256x128xf32>
    %cst_5 = arith.constant 0.000000e+00 : f32
    %6 = vector.broadcast %cst_5 : f32 to vector<256x128xf32>
    %7 = arith.maximumf %5, %6 : vector<256x128xf32>
    %8 = arith.truncf %7 : vector<256x128xf32> to vector<256x128xbf16>
    %c0_6 = arith.constant 0 : index
    %c0_7 = arith.constant 0 : index
    %9 = vector.load %arg4[%c0_6, %c0_7] : memref<128x64xbf16, #tpu.memory_space<vmem>>, vector<128x64xbf16>
    %cst_8 = arith.constant dense<0.000000e+00> : vector<256x64xf32>
    %10 = tpu.matmul %8, %9, %cst_8 {dimension_numbers = #tpu.dot_dimension_numbers<[1], [0], [0], [1], [0, 0, 1, 1], [], []>} : vector<256x128xbf16>, vector<128x64xbf16>, vector<256x64xf32> -> vector<256x64xf32>
    %c0_9 = arith.constant 0 : index
    %c0_10 = arith.constant 0 : index
    %11 = vector.load %arg5[%c0_9, %c0_10] : memref<1x64xf32, #tpu.memory_space<vmem>>, vector<1x64xf32>
    %12 = vector.broadcast %11 : vector<1x64xf32> to vector<256x64xf32>
    %13 = arith.addf %10, %12 : vector<256x64xf32>
    %c0_11 = arith.constant 0 : index
    %c0_12 = arith.constant 0 : index
    %14 = vector.load %arg6[%c0_11, %c0_12] : memref<256x64xf32, #tpu.memory_space<vmem>>, vector<256x64xf32>
    tpu.vector_store %arg6[%c0_11, %c0_12], %13 {strides = array<i32>} : memref<256x64xf32, #tpu.memory_space<vmem>>, vector<256x64xf32>,
    return
  }
  func.func @transform_0(%arg0: i32) -> (i32, i32) {
    %c0_i32 = arith.constant 0 : i32
    %c0_i32_0 = arith.constant 0 : i32
    return %arg0, %c0_i32 : i32, i32
  }
  func.func @transform_1(%arg0: i32) -> (i32, i32) {
    %c0_i32 = arith.constant 0 : i32
    %c0_i32_0 = arith.constant 0 : i32
    %c0_i32_1 = arith.constant 0 : i32
    return %c0_i32, %c0_i32_0 : i32, i32
  }
  func.func @transform_2(%arg0: i32) -> (i32, i32) {
    %c0_i32 = arith.constant 0 : i32
    %c0_i32_0 = arith.constant 0 : i32
    %c0_i32_1 = arith.constant 0 : i32
    return %c0_i32, %c0_i32_0 : i32, i32
  }
  func.func @transform_3(%arg0: i32) -> (i32, i32) {
    %c0_i32 = arith.constant 0 : i32
    %c0_i32_0 = arith.constant 0 : i32
    %c0_i32_1 = arith.constant 0 : i32
    return %c0_i32, %c0_i32_0 : i32, i32
  }
  func.func @transform_4(%arg0: i32) -> (i32, i32) {
    %c0_i32 = arith.constant 0 : i32
    %c0_i32_0 = arith.constant 0 : i32
    %c0_i32_1 = arith.constant 0 : i32
    return %c0_i32, %c0_i32_0 : i32, i32
  }
  func.func @transform_5(%arg0: i32) -> (i32, i32) {
    %c0_i32 = arith.constant 0 : i32
    %c0_i32_0 = arith.constant 0 : i32
    return %arg0, %c0_i32 : i32, i32
  }
}

</mosaic_0001>

<llo_original>
// kernel: tpu_custom_call.1
$region0: #{tpu_custom_call.1}
  #allocation0 [shape = 'u32[]', space=smem, size = 0x4, offset = 0x4, fixed_abs, tag = 'smem constant byte address 0x4 - core index']
  #allocation1 [shape = 'u32[144,128]{1,0:T(1,128)}', space=vmem, size = 0x12000, scoped, tag = 'internal scratch']
  %s0 = inlined_call_operand.vmem [shape: bf16[512,32], index: 0, kind: input, shape index: {}]
  %s1 = inlined_call_operand.vmem [shape: bf16[32,128], index: 1, kind: input, shape index: {}]
  %s2 = inlined_call_operand.vmem [shape: f32[1,128], index: 2, kind: input, shape index: {}]
  %s3 = inlined_call_operand.vmem [shape: bf16[128,64], index: 3, kind: input, shape index: {}]
  %s4 = inlined_call_operand.vmem [shape: f32[1,64], index: 4, kind: input, shape index: {}]
  %s5 = inlined_call_operand.vmem [shape: f32[512,64], index: 5, kind: output, shape index: {}]
  %s6 = sld [smem:[#allocation0]]
  $region53: #{tpu_custom_call.1} parent=0
    _
  %s8 = ssub.s32 1, %s6
  %s9 = scalar_select 0, %s8, %s6
  loop: start=0, step=1, limit=4
  $region2: #{tpu_custom_call.1} parent=0 // loop_pre_header
    _
  $region3: #{tpu_custom_call.1} parent=0 // loop_header
    %s11 = sphi 0, %s15
    %p12 = scmp.ge.s32.totalorder %s11, 4
    %s21 = sphi 0, %s23
    %s24 = sphi 0, %s21
    %s25 = sphi 0, %s24
    %s41 = sphi 0, %s25
    %s45 = sphi 0, %s45
    %s47 = sphi 0, %s45
    %s48 = sphi 0, %s47
    %s62 = sphi 0, %s48
    %s66 = sphi 0, %s66
    %s68 = sphi 0, %s66
    %s69 = sphi 0, %s68
    %s83 = sphi 0, %s69
    %s87 = sphi 0, %s87
    %s89 = sphi 0, %s87
    %s90 = sphi 0, %s89
    %s104 = sphi 0, %s90
    %s108 = sphi 0, %s108
    %s110 = sphi 0, %s108
    %s111 = sphi 0, %s110
    %s125 = sphi 0, %s111
    %s131 = sphi 0, %s133
    %s134 = sphi 0, %s131
    %s135 = sphi 0, %s134
    %s151 = sphi 0, %s135
  $region4: #{tpu_custom_call.1} parent=0 // loop_header_branch
    %14 = sbr.rel (%p12) target = $region8
  $region5: #{tpu_custom_call.1} parent=0 // loop_body
    %s16 = ssub.s32 %s11, 1
    %s17 = ssub.s32 %s11, 2
    %s18 = sadd.s32 %s11, 1
    %s19 = ssub.s32 %s11, %s18
    %p20 = scmp.eq.s32.totalorder %s19, 0
    %s22 = sadd.s32 %s21, 1
    %s23 = scalar_select %p20, %s21, %s22
    %p26 = pneg %p20
    %p27 = scmp.eq.s32.totalorder %s11, 1
    %p28 = por %p26, %p27
    %p29 = scmp.ne.s32.totalorder %s21, %s24
    %p30 = scmp.eq.s32.totalorder %s11, 0
    %p31 = por %p29, %p30
    %p32 = scmp.ne.s32.totalorder %s21, %s24
    %p33 = scmp.eq.s32.totalorder %s16, 1
    %p34 = por %p32, %p33
    %p35 = scmp.ne.s32.totalorder %s24, %s25
    %p36 = scmp.eq.s32.totalorder %s16, 0
    %p37 = por %p35, %p36
    %p38 = scmp.ne.s32.totalorder %s24, %s25
    %p39 = scmp.eq.s32.totalorder %s17, 1
    %p40 = por %p38, %p39
    %p42 = scmp.ne.s32.totalorder %s25, %s41
    %p43 = scmp.eq.s32.totalorder %s17, 0
    %p44 = por %p42, %p43
    %s46 = sadd.s32 %s45, 1
    %p49 = scmp.eq.s32.totalorder %s11, 1
    %p50 = scmp.ne.s32.totalorder %s45, %s47
    %p51 = scmp.eq.s32.totalorder %s11, 0
    %p52 = por %p50, %p51
    %p53 = scmp.ne.s32.totalorder %s45, %s47
    %p54 = scmp.eq.s32.totalorder %s16, 1
    %p55 = por %p53, %p54
    %p56 = scmp.ne.s32.totalorder %s47, %s48
    %p57 = scmp.eq.s32.totalorder %s16, 0
    %p58 = por %p56, %p57
    %p59 = scmp.ne.s32.totalorder %s47, %s48
    %p60 = scmp.eq.s32.totalorder %s17, 1
    %p61 = por %p59, %p60
    %p63 = scmp.ne.s32.totalorder %s48, %s62
    %p64 = scmp.eq.s32.totalorder %s17, 0
    %p65 = por %p63, %p64
    %s67 = sadd.s32 %s66, 1
    %p70 = scmp.eq.s32.totalorder %s11, 1
    %p71 = scmp.ne.s32.totalorder %s66, %s68
    %p72 = scmp.eq.s32.totalorder %s11, 0
    %p73 = por %p71, %p72
    %p74 = scmp.ne.s32.totalorder %s66, %s68
    %p75 = scmp.eq.s32.totalorder %s16, 1
    %p76 = por %p74, %p75
    %p77 = scmp.ne.s32.totalorder %s68, %s69
    %p78 = scmp.eq.s32.totalorder %s16, 0
    %p79 = por %p77, %p78
    %p80 = scmp.ne.s32.totalorder %s68, %s69
    %p81 = scmp.eq.s32.totalorder %s17, 1
    %p82 = por %p80, %p81
    %p84 = scmp.ne.s32.totalorder %s69, %s83
    %p85 = scmp.eq.s32.totalorder %s17, 0
    %p86 = por %p84, %p85
    %s88 = sadd.s32 %s87, 1
    %p91 = scmp.eq.s32.totalorder %s11, 1
    %p92 = scmp.ne.s32.totalorder %s87, %s89
    %p93 = scmp.eq.s32.totalorder %s11, 0
    %p94 = por %p92, %p93
    %p95 = scmp.ne.s32.totalorder %s87, %s89
    %p96 = scmp.eq.s32.totalorder %s16, 1
    %p97 = por %p95, %p96
    %p98 = scmp.ne.s32.totalorder %s89, %s90
    %p99 = scmp.eq.s32.totalorder %s16, 0
    %p100 = por %p98, %p99
    %p101 = scmp.ne.s32.totalorder %s89, %s90
    %p102 = scmp.eq.s32.totalorder %s17, 1
    %p103 = por %p101, %p102
    %p105 = scmp.ne.s32.totalorder %s90, %s104
    %p106 = scmp.eq.s32.totalorder %s17, 0
    %p107 = por %p105, %p106
    %s109 = sadd.s32 %s108, 1
    %p112 = scmp.eq.s32.totalorder %s11, 1
    %p113 = scmp.ne.s32.totalorder %s108, %s110
    %p114 = scmp.eq.s32.totalorder %s11, 0
    %p115 = por %p113, %p114
    %p116 = scmp.ne.s32.totalorder %s108, %s110
    %p117 = scmp.eq.s32.totalorder %s16, 1
    %p118 = por %p116, %p117
    %p119 = scmp.ne.s32.totalorder %s110, %s111
    %p120 = scmp.eq.s32.totalorder %s16, 0
    %p121 = por %p119, %p120
    %p122 = scmp.ne.s32.totalorder %s110, %s111
    %p123 = scmp.eq.s32.totalorder %s17, 1
    %p124 = por %p122, %p123
    %p126 = scmp.ne.s32.totalorder %s111, %s125
    %p127 = scmp.eq.s32.totalorder %s17, 0
    %p128 = por %p126, %p127
    %s129 = ssub.s32 %s11, %s18
    %p130 = scmp.eq.s32.totalorder %s129, 0
    %s132 = sadd.s32 %s131, 1
    %s133 = scalar_select %p130, %s131, %s132
    %p136 = pneg %p130
    %p137 = scmp.eq.s32.totalorder %s11, 1
    %p138 = por %p136, %p137
    %p139 = scmp.ne.s32.totalorder %s131, %s134
    %p140 = scmp.eq.s32.totalorder %s11, 0
    %p141 = por %p139, %p140
    %p142 = scmp.ne.s32.totalorder %s131, %s134
    %p143 = scmp.eq.s32.totalorder %s16, 1
    %p144 = por %p142, %p143
    %p145 = scmp.ne.s32.totalorder %s134, %s135
    %p146 = scmp.eq.s32.totalorder %s16, 0
    %p147 = por %p145, %p146
    %p148 = scmp.ne.s32.totalorder %s134, %s135
    %p149 = scmp.eq.s32.totalorder %s17, 1
    %p150 = por %p148, %p149
    %p152 = scmp.ne.s32.totalorder %s135, %s151
    %p153 = scmp.eq.s32.totalorder %s17, 0
    %p154 = por %p152, %p153
    %p155 = scmp.le.s32.totalorder 1, %s11
    %p156 = scmp.lt.s32.totalorder %s11, 3
    %p157 = pnand %p155, %p156
    %p158 = pneg %p157
    // Predicated region
    $region9: #{tpu_custom_call.1} parent=5 // pred_check
      _
    $region10: #{tpu_custom_call.1} parent=5 // pred_check_branch
      %160 = sbr.rel (%p157) target = $region12
    $region11: #{tpu_custom_call.1} parent=5 // pred_region
      %s161 = ssub.s32 %s11, 1
      // Predicated region
      $region13: #{tpu_custom_call.1} parent=11 // pred_check
        %p162 = pneg %p58
      $region14: #{tpu_custom_call.1} parent=11 // pred_check_branch
        %164 = sbr.rel (%p162) target = $region16
      $region15: #{tpu_custom_call.1} parent=11 // pred_region
        _
      $region16: #{tpu_custom_call.1} parent=11 // pred_fallthru
        _
      // Predicated region
      $region17: #{tpu_custom_call.1} parent=11 // pred_check
        %p165 = pneg %p79
      $region18: #{tpu_custom_call.1} parent=11 // pred_check_branch
        %167 = sbr.rel (%p165) target = $region20
      $region19: #{tpu_custom_call.1} parent=11 // pred_region
        _
      $region20: #{tpu_custom_call.1} parent=11 // pred_fallthru
        _
      // Predicated region
      $region21: #{tpu_custom_call.1} parent=11 // pred_check
        %p168 = pneg %p100
      $region22: #{tpu_custom_call.1} parent=11 // pred_check_branch
        %170 = sbr.rel (%p168) target = $region24
      $region23: #{tpu_custom_call.1} parent=11 // pred_region
        _
      $region24: #{tpu_custom_call.1} parent=11 // pred_fallthru
        _
      // Predicated region
      $region25: #{tpu_custom_call.1} parent=11 // pred_check
        %p171 = pneg %p121
      $region26: #{tpu_custom_call.1} parent=11 // pred_check_branch
        %173 = sbr.rel (%p171) target = $region28
      $region27: #{tpu_custom_call.1} parent=11 // pred_region
        _
      $region28: #{tpu_custom_call.1} parent=11 // pred_fallthru
        _
    $region12: #{tpu_custom_call.1} parent=5 // pred_fallthru
      _
    %p174 = scmp.lt.s32.totalorder %s11, 2
    // Predicated region
    $region29: #{tpu_custom_call.1} parent=5 // pred_check
      %p175 = pneg %p174
    $region30: #{tpu_custom_call.1} parent=5 // pred_check_branch
      %177 = sbr.rel (%p175) target = $region32
    $region31: #{tpu_custom_call.1} parent=5 // pred_region
      // Predicated region
      $region33: #{tpu_custom_call.1} parent=31 // pred_check
        %p178 = pneg %p31
      $region34: #{tpu_custom_call.1} parent=31 // pred_check_branch
        %180 = sbr.rel (%p178) target = $region36
      $region35: #{tpu_custom_call.1} parent=31 // pred_region
        %s181 = smul.u32 32, %s11
        %p182 = scmp.lt.s32.totalorder %s181, 63
        %s183 = scalar_select %p182, %s181, 63
        %s184 = smul.addr %s183, 4
        %s185 = scalar_lea.vmem %s0, %s184
        %s186 = smul.u32 32, %s11
      $region36: #{tpu_custom_call.1} parent=31 // pred_fallthru
        _
    $region32: #{tpu_custom_call.1} parent=5 // pred_fallthru
      _
    %p187 = scmp.le.s32.totalorder 1, %s11
    %p188 = scmp.lt.s32.totalorder %s11, 3
    %p189 = pnand %p187, %p188
    %p190 = pneg %p189
    // Predicated region
    $region37: #{tpu_custom_call.1} parent=5 // pred_check
      _
    $region38: #{tpu_custom_call.1} parent=5 // pred_check_branch
      %192 = sbr.rel (%p189) target = $region40
    $region39: #{tpu_custom_call.1} parent=5 // pred_region
      %s193 = ssub.s32 %s11, 1
      %s194 = smul.u32 32, %s16
      %p195 = scmp.lt.s32.totalorder %s194, 63
      %s196 = scalar_select %p195, %s194, 63
      %s197 = smul.addr %s196, 4
      %s198 = scalar_lea.vmem %s0, %s197
      %p199 = pneg %p37
      %p200 = pneg %p34
      %p201 = pneg %p58
      %p202 = pneg %p55
      %p203 = pneg %p79
      %p204 = pneg %p76
      %p205 = pneg %p100
      %p206 = pneg %p97
      %p207 = pneg %p121
      %p208 = pneg %p118
      %p209 = pneg %p147
      %p210 = pneg %p144
      %s211 = smul.u32 32, %s16
      %p212 = scmp.lt.s32.totalorder %s211, 63
      %s213 = scalar_select %p212, %s211, 63
      %s214 = smul.addr %s213, 8
      %s215 = scalar_lea.vmem %s5, %s214
      %s216 = smul.u32 32, %s16
      %p217 = scmp.lt.s32.totalorder %s216, 63
      %s218 = scalar_select %p217, %s216, 63
      %s219 = smul.addr %s218, 4
      %s220 = scalar_lea.vmem %s0, %s219
      %s221 = smul.u32 32, %s16
      %s222 = smul.u32 32, %s16
      %p223 = scmp.lt.s32.totalorder %s222, 63
      %s224 = scalar_select %p223, %s222, 63
      %s225 = smul.addr %s224, 8
      %s226 = scalar_lea.vmem %s5, %s225
      %s227 = smul.u32 32, %s16
      %v229 = vld [vmem:[%s220] sm:$0xf]
      %v230 = vld [vmem:[%s220 + $0x4] sm:$0xf]
      %v231 = vld [vmem:[%s220 + $0x8] sm:$0xf]
      %v232 = vld [vmem:[%s220 + $0xc] sm:$0xf]
      %v233 = vld [vmem:[%s220 + $0x10] sm:$0xf]
      %v234 = vld [vmem:[%s220 + $0x14] sm:$0xf]
      %v235 = vld [vmem:[%s220 + $0x18] sm:$0xf]
      %v236 = vld [vmem:[%s220 + $0x1c] sm:$0xf]
      %v237 = vld [vmem:[%s220 + $0x20] sm:$0xf]
      %v238 = vld [vmem:[%s220 + $0x24] sm:$0xf]
      %v239 = vld [vmem:[%s220 + $0x28] sm:$0xf]
      %v240 = vld [vmem:[%s220 + $0x2c] sm:$0xf]
      %v241 = vld [vmem:[%s220 + $0x30] sm:$0xf]
      %v242 = vld [vmem:[%s220 + $0x34] sm:$0xf]
      %v243 = vld [vmem:[%s220 + $0x38] sm:$0xf]
      %v244 = vld [vmem:[%s220 + $0x3c] sm:$0xf]
      %v245 = vld [vmem:[%s220 + $0x40] sm:$0xf]
      %v246 = vld [vmem:[%s220 + $0x44] sm:$0xf]
      %v247 = vld [vmem:[%s220 + $0x48] sm:$0xf]
      %v248 = vld [vmem:[%s220 + $0x4c] sm:$0xf]
      %v249 = vld [vmem:[%s220 + $0x50] sm:$0xf]
      %v250 = vld [vmem:[%s220 + $0x54] sm:$0xf]
      %v251 = vld [vmem:[%s220 + $0x58] sm:$0xf]
      %v252 = vld [vmem:[%s220 + $0x5c] sm:$0xf]
      %v253 = vld [vmem:[%s220 + $0x60] sm:$0xf]
      %v254 = vld [vmem:[%s220 + $0x64] sm:$0xf]
      %v255 = vld [vmem:[%s220 + $0x68] sm:$0xf]
      %v256 = vld [vmem:[%s220 + $0x6c] sm:$0xf]
      %v257 = vld [vmem:[%s220 + $0x70] sm:$0xf]
      %v258 = vld [vmem:[%s220 + $0x74] sm:$0xf]
      %v259 = vld [vmem:[%s220 + $0x78] sm:$0xf]
      %v260 = vld [vmem:[%s220 + $0x7c] sm:$0xf]
      %v261 = vld [vmem:[%s1] sm:$0xf]
      %v262 = vld [vmem:[%s1 + $0x4] sm:$0xf]
      %v263 = vld [vmem:[%s1 + $0x8] sm:$0xf]
      %v264 = vld [vmem:[%s1 + $0xc] sm:$0xf]
      %v265 = vld [vmem:[%s2] sm:$0x1]
      %v267 = vlaneseq
      %v268 = vshrl.u32 %v267, 7
      %v269 = vsub.s32 0, %v268
      %v270 = vrot.slane %v265, %v269
      %v304 = vunpack.c.l.b16 %v229
      %v305 = vunpack.c.l.b16 %v230
      %v306 = vunpack.c.l.b16 %v231
      %v307 = vunpack.c.l.b16 %v232
      %v308 = vunpack.c.l.b16 %v233
      %v309 = vunpack.c.l.b16 %v234
      %v310 = vunpack.c.l.b16 %v235
      %v311 = vunpack.c.l.b16 %v236
      %v312 = vunpack.c.l.b16 %v237
      %v313 = vunpack.c.l.b16 %v238
      %v314 = vunpack.c.l.b16 %v239
      %v315 = vunpack.c.l.b16 %v240
      %v316 = vunpack.c.l.b16 %v241
      %v317 = vunpack.c.l.b16 %v242
      %v318 = vunpack.c.l.b16 %v243
      %v319 = vunpack.c.l.b16 %v244
      %v320 = vunpack.c.l.b16 %v245
      %v321 = vunpack.c.l.b16 %v246
      %v322 = vunpack.c.l.b16 %v247
      %v323 = vunpack.c.l.b16 %v248
      %v324 = vunpack.c.l.b16 %v249
      %v325 = vunpack.c.l.b16 %v250
      %v326 = vunpack.c.l.b16 %v251
      %v327 = vunpack.c.l.b16 %v252
      %v328 = vunpack.c.l.b16 %v253
      %v329 = vunpack.c.l.b16 %v254
      %v330 = vunpack.c.l.b16 %v255
      %v331 = vunpack.c.l.b16 %v256
      %v332 = vunpack.c.l.b16 %v257
      %v333 = vunpack.c.l.b16 %v258
      %v334 = vunpack.c.l.b16 %v259
      %v335 = vunpack.c.l.b16 %v260
      %v336 = vpack.c.b16 %v305, %v304
      %v337 = vpack.c.b16 %v307, %v306
      %v338 = vpack.c.b16 %v309, %v308
      %v339 = vpack.c.b16 %v311, %v310
      %v340 = vpack.c.b16 %v313, %v312
      %v341 = vpack.c.b16 %v315, %v314
      %v342 = vpack.c.b16 %v317, %v316
      %v343 = vpack.c.b16 %v319, %v318
      %v344 = vpack.c.b16 %v321, %v320
      %v345 = vpack.c.b16 %v323, %v322
      %v346 = vpack.c.b16 %v325, %v324
      %v347 = vpack.c.b16 %v327, %v326
      %v348 = vpack.c.b16 %v329, %v328
      %v349 = vpack.c.b16 %v331, %v330
      %v350 = vpack.c.b16 %v333, %v332
      %v351 = vpack.c.b16 %v335, %v334
      %v356 = vunpack.c.l.b16 %v261
      %v357 = vunpack.c.l.b16 %v262
      %v358 = vunpack.c.l.b16 %v263
      %v359 = vunpack.c.l.b16 %v264
      %v360 = vpack.c.b16 %v357, %v356
      %v361 = vpack.c.b16 %v359, %v358
      %vm364 = vcmask 261120
      %v366 = vsel %vm364, %v336, 0
      %v369 = vsel %vm364, %v337, 0
      %v372 = vsel %vm364, %v338, 0
      %v375 = vsel %vm364, %v339, 0
      %v378 = vsel %vm364, %v340, 0
      %v381 = vsel %vm364, %v341, 0
      %v384 = vsel %vm364, %v342, 0
      %v387 = vsel %vm364, %v343, 0
      %v390 = vsel %vm364, %v344, 0
      %v393 = vsel %vm364, %v345, 0
      %v396 = vsel %vm364, %v346, 0
      %v399 = vsel %vm364, %v347, 0
      %v402 = vsel %vm364, %v348, 0
      %v405 = vsel %vm364, %v349, 0
      %v408 = vsel %vm364, %v350, 0
      %v411 = vsel %vm364, %v351, 0
      %413 = vmatprep.subr.bf16.mxu0 0
      %414 = vmatpush1.bf16.msra.mxu0 0
      %415 = vmatprep.subr.bf16.mxu0 0
      %416 = vmatpush1.bf16.msra.mxu0 0
      %417 = vmatprep.subr.bf16.mxu0 0
      %418 = vmatpush1.bf16.msra.mxu0 0
      %419 = vmatprep.subr.bf16.mxu0 0
      %420 = vmatpush1.bf16.msra.mxu0 0
      %421 = vmatprep.subr.bf16.mxu0 0
      %422 = vmatpush1.bf16.msra.mxu0 0
      %423 = vmatprep.subr.bf16.mxu0 0
      %424 = vmatpush1.bf16.msra.mxu0 0
      %425 = vmatprep.subr.bf16.mxu0 0
      %426 = vmatpush1.bf16.msra.mxu0 %v361
      %427 = vmatprep.subr.bf16.mxu0 0
      %428 = vmatpush1.bf16.msra.mxu0 %v360
      %429 = vmatprep.subr.bf16.mxu0 0
      %430 = vmatpush2.bf16.msra.mxu0 0
      %431 = vmatprep.subr.bf16.mxu0 0
      %432 = vmatpush2.bf16.msra.mxu0 0
      %433 = vmatprep.subr.bf16.mxu0 0
      %434 = vmatpush2.bf16.msra.mxu0 0
      %435 = vmatprep.subr.bf16.mxu0 0
      %436 = vmatpush2.bf16.msra.mxu0 0
      %437 = vmatprep.subr.bf16.mxu0 0
      %438 = vmatpush2.bf16.msra.mxu0 0
      %439 = vmatprep.subr.bf16.mxu0 0
      %440 = vmatpush2.bf16.msra.mxu0 0
      %441 = vmatprep.subr.bf16.mxu0 0
      %442 = vmatpush2.bf16.msra.mxu0 0
      %443 = vmatprep.subr.bf16.mxu0 0
      %444 = vmatpush2.bf16.msra.mxu0 0
      %445 = vmatprep.mubr.bf16.mxu0 0
      %446 = vmatmul.mubr.bf16.gmra.mxu0 %v366
      %v447 = vpop.f32.mrf.mxu0
      %v448 = vadd.f32 %v270, %v447
      %v449 = vpop.f32.mrf.mxu0
      %v450 = vpop.f32.mrf.mxu0
      %v451 = vadd.f32 %v270, %v450
      %v452 = vpop.f32.mrf.mxu0
      %453 = vmatprep.mubr.bf16.mxu0 0
      %454 = vmatmul.mubr.bf16.gmra.mxu0 %v369
      %v455 = vpop.f32.mrf.mxu0
      %v456 = vadd.f32 %v270, %v455
      %v457 = vpop.f32.mrf.mxu0
      %v458 = vpop.f32.mrf.mxu0
      %v459 = vadd.f32 %v270, %v458
      %v460 = vpop.f32.mrf.mxu0
      %461 = vmatprep.mubr.bf16.mxu0 0
      %462 = vmatmul.mubr.bf16.gmra.mxu0 %v372
      %v463 = vpop.f32.mrf.mxu0
      %v464 = vadd.f32 %v270, %v463
      %v465 = vpop.f32.mrf.mxu0
      %v466 = vpop.f32.mrf.mxu0
      %v467 = vadd.f32 %v270, %v466
      %v468 = vpop.f32.mrf.mxu0
      %469 = vmatprep.mubr.bf16.mxu0 0
      %470 = vmatmul.mubr.bf16.gmra.mxu0 %v375
      %v471 = vpop.f32.mrf.mxu0
      %v472 = vadd.f32 %v270, %v471
      %v473 = vpop.f32.mrf.mxu0
      %v474 = vpop.f32.mrf.mxu0
      %v475 = vadd.f32 %v270, %v474
      %v476 = vpop.f32.mrf.mxu0
      %477 = vmatprep.mubr.bf16.mxu0 0
      %478 = vmatmul.mubr.bf16.gmra.mxu0 %v378
      %v479 = vpop.f32.mrf.mxu0
      %v480 = vadd.f32 %v270, %v479
      %v481 = vpop.f32.mrf.mxu0
      %v482 = vpop.f32.mrf.mxu0
      %v483 = vadd.f32 %v270, %v482
      %v484 = vpop.f32.mrf.mxu0
      %485 = vmatprep.mubr.bf16.mxu0 0
      %486 = vmatmul.mubr.bf16.gmra.mxu0 %v381
      %v487 = vpop.f32.mrf.mxu0
      %v488 = vadd.f32 %v270, %v487
      %v489 = vpop.f32.mrf.mxu0
      %v490 = vpop.f32.mrf.mxu0
      %v491 = vadd.f32 %v270, %v490
      %v492 = vpop.f32.mrf.mxu0
      %493 = vmatprep.mubr.bf16.mxu0 0
      %494 = vmatmul.mubr.bf16.gmra.mxu0 %v384
      %v495 = vpop.f32.mrf.mxu0
      %v496 = vadd.f32 %v270, %v495
      %v497 = vpop.f32.mrf.mxu0
      %v498 = vpop.f32.mrf.mxu0
      %v499 = vadd.f32 %v270, %v498
      %v500 = vpop.f32.mrf.mxu0
      %501 = vmatprep.mubr.bf16.mxu0 0
      %502 = vmatmul.mubr.bf16.gmra.mxu0 %v387
      %v503 = vpop.f32.mrf.mxu0
      %v504 = vadd.f32 %v270, %v503
      %v505 = vpop.f32.mrf.mxu0
      %v506 = vpop.f32.mrf.mxu0
      %v507 = vadd.f32 %v270, %v506
      %v508 = vpop.f32.mrf.mxu0
      %509 = vmatprep.mubr.bf16.mxu0 0
      %510 = vmatmul.mubr.bf16.gmra.mxu0 %v390
      %v511 = vpop.f32.mrf.mxu0
      %v512 = vadd.f32 %v270, %v511
      %v513 = vpop.f32.mrf.mxu0
      %v514 = vpop.f32.mrf.mxu0
      %v515 = vadd.f32 %v270, %v514
      %v516 = vpop.f32.mrf.mxu0
      %517 = vmatprep.mubr.bf16.mxu0 0
      %518 = vmatmul.mubr.bf16.gmra.mxu0 %v393
      %v519 = vpop.f32.mrf.mxu0
      %v520 = vadd.f32 %v270, %v519
      %v521 = vpop.f32.mrf.mxu0
      %v522 = vpop.f32.mrf.mxu0
      %v523 = vadd.f32 %v270, %v522
      %v524 = vpop.f32.mrf.mxu0
      %525 = vmatprep.mubr.bf16.mxu0 0
      %526 = vmatmul.mubr.bf16.gmra.mxu0 %v396
      %v527 = vpop.f32.mrf.mxu0
      %v528 = vadd.f32 %v270, %v527
      %v529 = vpop.f32.mrf.mxu0
      %v530 = vpop.f32.mrf.mxu0
      %v531 = vadd.f32 %v270, %v530
      %v532 = vpop.f32.mrf.mxu0
      %533 = vmatprep.mubr.bf16.mxu0 0
      %534 = vmatmul.mubr.bf16.gmra.mxu0 %v399
      %v535 = vpop.f32.mrf.mxu0
      %v536 = vadd.f32 %v270, %v535
      %v537 = vpop.f32.mrf.mxu0
      %v538 = vpop.f32.mrf.mxu0
      %v539 = vadd.f32 %v270, %v538
      %v540 = vpop.f32.mrf.mxu0
      %541 = vmatprep.mubr.bf16.mxu0 0
      %542 = vmatmul.mubr.bf16.gmra.mxu0 %v402
      %v543 = vpop.f32.mrf.mxu0
      %v544 = vadd.f32 %v270, %v543
      %v545 = vpop.f32.mrf.mxu0
      %v546 = vpop.f32.mrf.mxu0
      %v547 = vadd.f32 %v270, %v546
      %v548 = vpop.f32.mrf.mxu0
      %549 = vmatprep.mubr.bf16.mxu0 0
      %550 = vmatmul.mubr.bf16.gmra.mxu0 %v405
      %v551 = vpop.f32.mrf.mxu0
      %v552 = vadd.f32 %v270, %v551
      %v553 = vpop.f32.mrf.mxu0
      %v554 = vpop.f32.mrf.mxu0
      %v555 = vadd.f32 %v270, %v554
      %v556 = vpop.f32.mrf.mxu0
      %557 = vmatprep.mubr.bf16.mxu0 0
      %558 = vmatmul.mubr.bf16.gmra.mxu0 %v408
      %v559 = vpop.f32.mrf.mxu0
      %v560 = vadd.f32 %v270, %v559
      %v561 = vpop.f32.mrf.mxu0
      %v562 = vpop.f32.mrf.mxu0
      %v563 = vadd.f32 %v270, %v562
      %v564 = vpop.f32.mrf.mxu0
      %565 = vmatprep.mubr.bf16.mxu0 0
      %566 = vmatmul.mubr.bf16.gmra.mxu0 %v411
      %v567 = vpop.f32.mrf.mxu0
      %v568 = vadd.f32 %v270, %v567
      %v569 = vpop.f32.mrf.mxu0
      %v570 = vpop.f32.mrf.mxu0
      %v571 = vadd.f32 %v270, %v570
      %v572 = vpop.f32.mrf.mxu0
      %573 = vdwg.mxu0
      %v574 = vmax.f32 %v448, 0.0
      %v575 = vmax.f32 %v451, 0.0
      %v576 = vmax.f32 %v456, 0.0
      %v577 = vmax.f32 %v459, 0.0
      %v578 = vmax.f32 %v464, 0.0
      %v579 = vmax.f32 %v467, 0.0
      %v580 = vmax.f32 %v472, 0.0
      %v581 = vmax.f32 %v475, 0.0
      %v582 = vmax.f32 %v480, 0.0
      %v583 = vmax.f32 %v483, 0.0
      %v584 = vmax.f32 %v488, 0.0
      %v585 = vmax.f32 %v491, 0.0
      %v586 = vmax.f32 %v496, 0.0
      %v587 = vmax.f32 %v499, 0.0
      %v588 = vmax.f32 %v504, 0.0
      %v589 = vmax.f32 %v507, 0.0
      %v590 = vmax.f32 %v512, 0.0
      %v591 = vmax.f32 %v515, 0.0
      %v592 = vmax.f32 %v520, 0.0
      %v593 = vmax.f32 %v523, 0.0
      %v594 = vmax.f32 %v528, 0.0
      %v595 = vmax.f32 %v531, 0.0
      %v596 = vmax.f32 %v536, 0.0
      %v597 = vmax.f32 %v539, 0.0
      %v598 = vmax.f32 %v544, 0.0
      %v599 = vmax.f32 %v547, 0.0
      %v600 = vmax.f32 %v552, 0.0
      %v601 = vmax.f32 %v555, 0.0
      %v602 = vmax.f32 %v560, 0.0
      %v603 = vmax.f32 %v563, 0.0
      %v604 = vmax.f32 %v568, 0.0
      %v605 = vmax.f32 %v571, 0.0
      %v606 = vpack.c.bf16 %v575, %v574
      %v607 = vpack.c.bf16 %v577, %v576
      %v608 = vpack.c.bf16 %v579, %v578
      %v609 = vpack.c.bf16 %v581, %v580
      %v610 = vpack.c.bf16 %v583, %v582
      %v611 = vpack.c.bf16 %v585, %v584
      %v612 = vpack.c.bf16 %v587, %v586
      %v613 = vpack.c.bf16 %v589, %v588
      %v614 = vpack.c.bf16 %v591, %v590
      %v615 = vpack.c.bf16 %v593, %v592
      %v616 = vpack.c.bf16 %v595, %v594
      %v617 = vpack.c.bf16 %v597, %v596
      %v618 = vpack.c.bf16 %v599, %v598
      %v619 = vpack.c.bf16 %v601, %v600
      %v620 = vpack.c.bf16 %v603, %v602
      %v621 = vpack.c.bf16 %v605, %v604
      %v622 = vld [vmem:[%s3] sm:$0xf]
      %v623 = vld [vmem:[%s3 + $0x4] sm:$0xf]
      %v624 = vld [vmem:[%s3 + $0x8] sm:$0xf]
      %v625 = vld [vmem:[%s3 + $0xc] sm:$0xf]
      %v626 = vld [vmem:[%s3 + $0x10] sm:$0xf]
      %v627 = vld [vmem:[%s3 + $0x14] sm:$0xf]
      %v628 = vld [vmem:[%s3 + $0x18] sm:$0xf]
      %v629 = vld [vmem:[%s3 + $0x1c] sm:$0xf]
      %v630 = vld [vmem:[%s3 + $0x20] sm:$0xf]
      %v631 = vld [vmem:[%s3 + $0x24] sm:$0xf]
      %v632 = vld [vmem:[%s3 + $0x28] sm:$0xf]
      %v633 = vld [vmem:[%s3 + $0x2c] sm:$0xf]
      %v634 = vld [vmem:[%s3 + $0x30] sm:$0xf]
      %v635 = vld [vmem:[%s3 + $0x34] sm:$0xf]
      %v636 = vld [vmem:[%s3 + $0x38] sm:$0xf]
      %v637 = vld [vmem:[%s3 + $0x3c] sm:$0xf]
      %v638 = vld [vmem:[%s4] sm:$0x1]
      %v640 = vlaneseq
      %v641 = vshrl.u32 %v640, 7
      %v642 = vsub.s32 0, %v641
      %v643 = vrot.slane %v638, %v642
      %v661 = vunpack.c.l.b16 %v622
      %v662 = vunpack.c.l.b16 %v623
      %v663 = vunpack.c.l.b16 %v624
      %v664 = vunpack.c.l.b16 %v625
      %v665 = vunpack.c.l.b16 %v626
      %v666 = vunpack.c.l.b16 %v627
      %v667 = vunpack.c.l.b16 %v628
      %v668 = vunpack.c.l.b16 %v629
      %v669 = vunpack.c.l.b16 %v630
      %v670 = vunpack.c.l.b16 %v631
      %v671 = vunpack.c.l.b16 %v632
      %v672 = vunpack.c.l.b16 %v633
      %v673 = vunpack.c.l.b16 %v634
      %v674 = vunpack.c.l.b16 %v635
      %v675 = vunpack.c.l.b16 %v636
      %v676 = vunpack.c.l.b16 %v637
      %v677 = vpack.c.b16 %v662, %v661
      %v678 = vpack.c.b16 %v664, %v663
      %v679 = vpack.c.b16 %v666, %v665
      %v680 = vpack.c.b16 %v668, %v667
      %v681 = vpack.c.b16 %v670, %v669
      %v682 = vpack.c.b16 %v672, %v671
      %v683 = vpack.c.b16 %v674, %v673
      %v684 = vpack.c.b16 %v676, %v675
      %693 = vmatprep.subr.bf16.mxu0 0
      %694 = vmatpush1.bf16.msra.mxu0 %v684
      %695 = vmatprep.subr.bf16.mxu0 0
      %696 = vmatpush1.bf16.msra.mxu0 %v683
      %697 = vmatprep.subr.bf16.mxu0 0
      %698 = vmatpush1.bf16.msra.mxu0 %v682
      %699 = vmatprep.subr.bf16.mxu0 0
      %700 = vmatpush1.bf16.msra.mxu0 %v681
      %701 = vmatprep.subr.bf16.mxu0 0
      %702 = vmatpush1.bf16.msra.mxu0 %v680
      %703 = vmatprep.subr.bf16.mxu0 0
      %704 = vmatpush1.bf16.msra.mxu0 %v679
      %705 = vmatprep.subr.bf16.mxu0 0
      %706 = vmatpush1.bf16.msra.mxu0 %v678
      %707 = vmatprep.subr.bf16.mxu0 0
      %708 = vmatpush1.bf16.msra.mxu0 %v677
      %709 = vmatprep.subr.bf16.mxu0 0
      %710 = vmatpush2.bf16.msra.mxu0 0
      %711 = vmatprep.subr.bf16.mxu0 0
      %712 = vmatpush2.bf16.msra.mxu0 0
      %713 = vmatprep.subr.bf16.mxu0 0
      %714 = vmatpush2.bf16.msra.mxu0 0
      %715 = vmatprep.subr.bf16.mxu0 0
      %716 = vmatpush2.bf16.msra.mxu0 0
      %717 = vmatprep.subr.bf16.mxu0 0
      %718 = vmatpush2.bf16.msra.mxu0 0
      %719 = vmatprep.subr.bf16.mxu0 0
      %720 = vmatpush2.bf16.msra.mxu0 0
      %721 = vmatprep.subr.bf16.mxu0 0
      %722 = vmatpush2.bf16.msra.mxu0 0
      %723 = vmatprep.subr.bf16.mxu0 0
      %724 = vmatpush2.bf16.msra.mxu0 0
      %725 = vmatprep.mubr.bf16.mxu0 0
      %726 = vmatmul.mubr.bf16.gmra.mxu0 %v606
      %v727 = vpop.f32.mrf.mxu0
      %v728 = vadd.f32 %v643, %v727
      %v729 = vpop.f32.mrf.mxu0
      %v730 = vpop.f32.mrf.mxu0
      %v731 = vadd.f32 %v643, %v730
      %v732 = vpop.f32.mrf.mxu0
      %733 = vmatprep.mubr.bf16.mxu0 0
      %734 = vmatmul.mubr.bf16.gmra.mxu0 %v607
      %v735 = vpop.f32.mrf.mxu0
      %v736 = vadd.f32 %v643, %v735
      %v737 = vpop.f32.mrf.mxu0
      %v738 = vpop.f32.mrf.mxu0
      %v739 = vadd.f32 %v643, %v738
      %v740 = vpop.f32.mrf.mxu0
      %741 = vmatprep.mubr.bf16.mxu0 0
      %742 = vmatmul.mubr.bf16.gmra.mxu0 %v608
      %v743 = vpop.f32.mrf.mxu0
      %v744 = vadd.f32 %v643, %v743
      %v745 = vpop.f32.mrf.mxu0
      %v746 = vpop.f32.mrf.mxu0
      %v747 = vadd.f32 %v643, %v746
      %v748 = vpop.f32.mrf.mxu0
      %749 = vmatprep.mubr.bf16.mxu0 0
      %750 = vmatmul.mubr.bf16.gmra.mxu0 %v609
      %v751 = vpop.f32.mrf.mxu0
      %v752 = vadd.f32 %v643, %v751
      %v753 = vpop.f32.mrf.mxu0
      %v754 = vpop.f32.mrf.mxu0
      %v755 = vadd.f32 %v643, %v754
      %v756 = vpop.f32.mrf.mxu0
      %757 = vmatprep.mubr.bf16.mxu0 0
      %758 = vmatmul.mubr.bf16.gmra.mxu0 %v610
      %v759 = vpop.f32.mrf.mxu0
      %v760 = vadd.f32 %v643, %v759
      %v761 = vpop.f32.mrf.mxu0
      %v762 = vpop.f32.mrf.mxu0
      %v763 = vadd.f32 %v643, %v762
      %v764 = vpop.f32.mrf.mxu0
      %765 = vmatprep.mubr.bf16.mxu0 0
      %766 = vmatmul.mubr.bf16.gmra.mxu0 %v611
      %v767 = vpop.f32.mrf.mxu0
      %v768 = vadd.f32 %v643, %v767
      %v769 = vpop.f32.mrf.mxu0
      %v770 = vpop.f32.mrf.mxu0
      %v771 = vadd.f32 %v643, %v770
      %v772 = vpop.f32.mrf.mxu0
      %773 = vmatprep.mubr.bf16.mxu0 0
      %774 = vmatmul.mubr.bf16.gmra.mxu0 %v612
      %v775 = vpop.f32.mrf.mxu0
      %v776 = vadd.f32 %v643, %v775
      %v777 = vpop.f32.mrf.mxu0
      %v778 = vpop.f32.mrf.mxu0
      %v779 = vadd.f32 %v643, %v778
      %v780 = vpop.f32.mrf.mxu0
      %781 = vmatprep.mubr.bf16.mxu0 0
      %782 = vmatmul.mubr.bf16.gmra.mxu0 %v613
      %v783 = vpop.f32.mrf.mxu0
      %v784 = vadd.f32 %v643, %v783
      %v785 = vpop.f32.mrf.mxu0
      %v786 = vpop.f32.mrf.mxu0
      %v787 = vadd.f32 %v643, %v786
      %v788 = vpop.f32.mrf.mxu0
      %789 = vmatprep.mubr.bf16.mxu0 0
      %790 = vmatmul.mubr.bf16.gmra.mxu0 %v614
      %v791 = vpop.f32.mrf.mxu0
      %v792 = vadd.f32 %v643, %v791
      %v793 = vpop.f32.mrf.mxu0
      %v794 = vpop.f32.mrf.mxu0
      %v795 = vadd.f32 %v643, %v794
      %v796 = vpop.f32.mrf.mxu0
      %797 = vmatprep.mubr.bf16.mxu0 0
      %798 = vmatmul.mubr.bf16.gmra.mxu0 %v615
      %v799 = vpop.f32.mrf.mxu0
      %v800 = vadd.f32 %v643, %v799
      %v801 = vpop.f32.mrf.mxu0
      %v802 = vpop.f32.mrf.mxu0
      %v803 = vadd.f32 %v643, %v802
      %v804 = vpop.f32.mrf.mxu0
      %805 = vmatprep.mubr.bf16.mxu0 0
      %806 = vmatmul.mubr.bf16.gmra.mxu0 %v616
      %v807 = vpop.f32.mrf.mxu0
      %v808 = vadd.f32 %v643, %v807
      %v809 = vpop.f32.mrf.mxu0
      %v810 = vpop.f32.mrf.mxu0
      %v811 = vadd.f32 %v643, %v810
      %v812 = vpop.f32.mrf.mxu0
      %813 = vmatprep.mubr.bf16.mxu0 0
      %814 = vmatmul.mubr.bf16.gmra.mxu0 %v617
      %v815 = vpop.f32.mrf.mxu0
      %v816 = vadd.f32 %v643, %v815
      %v817 = vpop.f32.mrf.mxu0
      %v818 = vpop.f32.mrf.mxu0
      %v819 = vadd.f32 %v643, %v818
      %v820 = vpop.f32.mrf.mxu0
      %821 = vmatprep.mubr.bf16.mxu0 0
      %822 = vmatmul.mubr.bf16.gmra.mxu0 %v618
      %v823 = vpop.f32.mrf.mxu0
      %v824 = vadd.f32 %v643, %v823
      %v825 = vpop.f32.mrf.mxu0
      %v826 = vpop.f32.mrf.mxu0
      %v827 = vadd.f32 %v643, %v826
      %v828 = vpop.f32.mrf.mxu0
      %829 = vmatprep.mubr.bf16.mxu0 0
      %830 = vmatmul.mubr.bf16.gmra.mxu0 %v619
      %v831 = vpop.f32.mrf.mxu0
      %v832 = vadd.f32 %v643, %v831
      %v833 = vpop.f32.mrf.mxu0
      %v834 = vpop.f32.mrf.mxu0
      %v835 = vadd.f32 %v643, %v834
      %v836 = vpop.f32.mrf.mxu0
      %837 = vmatprep.mubr.bf16.mxu0 0
      %838 = vmatmul.mubr.bf16.gmra.mxu0 %v620
      %v839 = vpop.f32.mrf.mxu0
      %v840 = vadd.f32 %v643, %v839
      %v841 = vpop.f32.mrf.mxu0
      %v842 = vpop.f32.mrf.mxu0
      %v843 = vadd.f32 %v643, %v842
      %v844 = vpop.f32.mrf.mxu0
      %845 = vmatprep.mubr.bf16.mxu0 0
      %846 = vmatmul.mubr.bf16.gmra.mxu0 %v621
      %v847 = vpop.f32.mrf.mxu0
      %v848 = vadd.f32 %v643, %v847
      %v849 = vpop.f32.mrf.mxu0
      %v850 = vpop.f32.mrf.mxu0
      %v851 = vadd.f32 %v643, %v850
      %v852 = vpop.f32.mrf.mxu0
      %853 = vdwg.mxu0
      %vm854 = vcmask 523264
      %855 = vst.msk [vmem:[%s226] sm:$0xff] %vm854, %v728
      %856 = vst.msk [vmem:[%s226 + $0x8] sm:$0xff] %vm854, %v731
      %857 = vst.msk [vmem:[%s226 + $0x10] sm:$0xff] %vm854, %v736
      %858 = vst.msk [vmem:[%s226 + $0x18] sm:$0xff] %vm854, %v739
      %859 = vst.msk [vmem:[%s226 + $0x20] sm:$0xff] %vm854, %v744
      %860 = vst.msk [vmem:[%s226 + $0x28] sm:$0xff] %vm854, %v747
      %861 = vst.msk [vmem:[%s226 + $0x30] sm:$0xff] %vm854, %v752
      %862 = vst.msk [vmem:[%s226 + $0x38] sm:$0xff] %vm854, %v755
      %863 = vst.msk [vmem:[%s226 + $0x40] sm:$0xff] %vm854, %v760
      %864 = vst.msk [vmem:[%s226 + $0x48] sm:$0xff] %vm854, %v763
      %865 = vst.msk [vmem:[%s226 + $0x50] sm:$0xff] %vm854, %v768
      %866 = vst.msk [vmem:[%s226 + $0x58] sm:$0xff] %vm854, %v771
      %867 = vst.msk [vmem:[%s226 + $0x60] sm:$0xff] %vm854, %v776
      %868 = vst.msk [vmem:[%s226 + $0x68] sm:$0xff] %vm854, %v779
      %869 = vst.msk [vmem:[%s226 + $0x70] sm:$0xff] %vm854, %v784
      %870 = vst.msk [vmem:[%s226 + $0x78] sm:$0xff] %vm854, %v787
      %871 = vst.msk [vmem:[%s226 + $0x80] sm:$0xff] %vm854, %v792
      %872 = vst.msk [vmem:[%s226 + $0x88] sm:$0xff] %vm854, %v795
      %873 = vst.msk [vmem:[%s226 + $0x90] sm:$0xff] %vm854, %v800
      %874 = vst.msk [vmem:[%s226 + $0x98] sm:$0xff] %vm854, %v803
      %875 = vst.msk [vmem:[%s226 + $0xa0] sm:$0xff] %vm854, %v808
      %876 = vst.msk [vmem:[%s226 + $0xa8] sm:$0xff] %vm854, %v811
      %877 = vst.msk [vmem:[%s226 + $0xb0] sm:$0xff] %vm854, %v816
      %878 = vst.msk [vmem:[%s226 + $0xb8] sm:$0xff] %vm854, %v819
      %879 = vst.msk [vmem:[%s226 + $0xc0] sm:$0xff] %vm854, %v824
      %880 = vst.msk [vmem:[%s226 + $0xc8] sm:$0xff] %vm854, %v827
      %881 = vst.msk [vmem:[%s226 + $0xd0] sm:$0xff] %vm854, %v832
      %882 = vst.msk [vmem:[%s226 + $0xd8] sm:$0xff] %vm854, %v835
      %883 = vst.msk [vmem:[%s226 + $0xe0] sm:$0xff] %vm854, %v840
      %884 = vst.msk [vmem:[%s226 + $0xe8] sm:$0xff] %vm854, %v843
      %885 = vst.msk [vmem:[%s226 + $0xf0] sm:$0xff] %vm854, %v848
      %886 = vst.msk [vmem:[%s226 + $0xf8] sm:$0xff] %vm854, %v851
      %s887 = smul.u32 32, %s16
      %p888 = scmp.lt.s32.totalorder %s887, 63
      %s889 = scalar_select %p888, %s887, 63
      %s890 = smul.addr %s889, 8
      %s891 = scalar_lea.vmem %s5, %s890
      // Predicated region
      $region41: #{tpu_custom_call.1} parent=39 // pred_check
        %p892 = pneg %p144
      $region42: #{tpu_custom_call.1} parent=39 // pred_check_branch
        %894 = sbr.rel (%p892) target = $region44
      $region43: #{tpu_custom_call.1} parent=39 // pred_region
        %s895 = smul.u32 32, %s16
      $region44: #{tpu_custom_call.1} parent=39 // pred_fallthru
        _
    $region40: #{tpu_custom_call.1} parent=5 // pred_fallthru
      _
    %p896 = scmp.le.s32.totalorder 2, %s11
    // Predicated region
    $region45: #{tpu_custom_call.1} parent=5 // pred_check
      %p897 = pneg %p896
    $region46: #{tpu_custom_call.1} parent=5 // pred_check_branch
      %899 = sbr.rel (%p897) target = $region48
    $region47: #{tpu_custom_call.1} parent=5 // pred_region
      %s900 = ssub.s32 %s11, 2
      // Predicated region
      $region49: #{tpu_custom_call.1} parent=47 // pred_check
        %p901 = pneg %p150
      $region50: #{tpu_custom_call.1} parent=47 // pred_check_branch
        %903 = sbr.rel (%p901) target = $region52
      $region51: #{tpu_custom_call.1} parent=47 // pred_region
        %s904 = smul.u32 32, %s17
        %p905 = scmp.lt.s32.totalorder %s904, 63
        %s906 = scalar_select %p905, %s904, 63
        %s907 = smul.addr %s906, 8
        %s908 = scalar_lea.vmem %s5, %s907
      $region52: #{tpu_custom_call.1} parent=47 // pred_fallthru
        _
    $region48: #{tpu_custom_call.1} parent=5 // pred_fallthru
      _
  $region6: #{tpu_custom_call.1} parent=0 // loop_footer
    %s15 = sadd.s32 1, %s11
  $region7: #{tpu_custom_call.1} parent=0 // loop_footer_branch
    %10 = sbr.rel target = $region3
  $region8: #{tpu_custom_call.1} parent=0 // loop_exit
    _

</llo_original>
